<compile_context>
chip_gen: v5e
topology: v5e:2x2
jax: 0.10.0
libtpu: 0.0.40
codegen_flags: <defaults>
</compile_context>

<pallas_src>
import functools

import jax
import jax.numpy as jnp
from jax.experimental import pallas as pl
from jax.experimental.pallas import tpu as pltpu

LN_EPS = 1e-5  # torch.nn.LayerNorm default


def _round_up(x, m):
    return (x + m - 1) // m * m


def _pairtrans_kernel(x_ref, gamma_ref, beta_ref, w1_ref, b1_ref, w2_ref, b2_ref,
                      o_ref):
    # x_ref: (tm, C) tile of flattened pair rows.
    # --- LayerNorm over the channel dim in f32 (biased variance, like torch) ---
    x = x_ref[...].astype(jnp.float32)
    mean = jnp.mean(x, axis=-1, keepdims=True)
    xc = x - mean
    var = jnp.mean(xc * xc, axis=-1, keepdims=True)
    inv = jax.lax.rsqrt(var + LN_EPS)
    xn = xc * inv * gamma_ref[...].astype(jnp.float32) \
        + beta_ref[...].astype(jnp.float32)

    # --- Linear1 + ReLU ---
    # Feed the MXU native-dtype operands (bf16 in production); accumulate in f32.
    h = jnp.dot(xn.astype(w1_ref.dtype), w1_ref[...],
                preferred_element_type=jnp.float32)
    h = jnp.maximum(h + b1_ref[...].astype(jnp.float32), 0.0)

    # --- Linear2 ---
    y = jnp.dot(h.astype(w2_ref.dtype), w2_ref[...],
                preferred_element_type=jnp.float32)
    y = y + b2_ref[...].astype(jnp.float32)

    o_ref[...] = y.astype(o_ref.dtype)


def _pick_row_tile(N, C, H, itemsize, tm_max):
    """Largest sublane-aligned row tile that (a) leaves >=2 grid steps when there
    is enough work (v7x megacore) and (b) keeps the per-step working set under a
    conservative ~24 MiB VMEM budget (safe on v7x's 64 MiB / 32 MiB scoped)."""
    tm = max(8, min(tm_max, _round_up(pl.cdiv(N, 2), 8)))

    budget = 24 * 1024 * 1024

    def need(t):
        io = 2 * 2 * t * C * itemsize            # double-buffered in + out tiles
        mid = t * (2 * C + H) * 4                # f32 xn / h / y live values
        wts = 2 * 2 * C * H * itemsize           # W1 + W2, double-buffered
        return io + mid + wts

    while tm > 8 and need(tm) > budget:
        tm = max(8, _round_up(tm // 2, 8))
    return tm


@functools.partial(jax.jit, static_argnames=("tm",))
def pair_trans(z, gamma, beta, w1, b1, w2, b2, *, tm=1024):
    """z: (B, L, L, C) channels-last.  Returns same shape/dtype.

    For peak TPU throughput C (z_dim) should be a multiple of 128 so the
    channel axis is lane-dense (production z_dim=128 qualifies); smaller C is
    handled correctly but uses partially-masked vector stores.
    """
    B, L1, L2, C = z.shape
    H = w1.shape[1]
    N = B * L1 * L2

    x = z.reshape(N, C)

    itemsize = jnp.dtype(z.dtype).itemsize
    tm_eff = _pick_row_tile(N, C, H, itemsize, tm)

    # Remainder-safe grid: pad rows to a multiple of the tile; padded rows
    # compute finite garbage (xc == 0) and are sliced off afterwards.
    n_pad = _round_up(N, tm_eff)
    if n_pad != N:
        x = jnp.pad(x, ((0, n_pad - N), (0, 0)))

    out = pl.pallas_call(
        _pairtrans_kernel,
        out_shape=jax.ShapeDtypeStruct((n_pad, C), z.dtype),
        grid_spec=pltpu.PrefetchScalarGridSpec(
            num_scalar_prefetch=0,
            grid=(n_pad // tm_eff,),
            in_specs=[
                pl.BlockSpec((tm_eff, C), lambda i: (i, 0)),   # x rows
                pl.BlockSpec((1, C), lambda i: (0, 0)),        # gamma
                pl.BlockSpec((1, C), lambda i: (0, 0)),        # beta
                pl.BlockSpec((C, H), lambda i: (0, 0)),        # W1 (resident)
                pl.BlockSpec((1, H), lambda i: (0, 0)),        # b1
                pl.BlockSpec((H, C), lambda i: (0, 0)),        # W2 (resident)
                pl.BlockSpec((1, C), lambda i: (0, 0)),        # b2
            ],
            out_specs=pl.BlockSpec((tm_eff, C), lambda i: (i, 0)),
        ),
        compiler_params=pltpu.CompilerParams(
            dimension_semantics=("parallel",),
            vmem_limit_bytes=64 * 1024 * 1024,
        ),
    )(x, gamma.reshape(1, C), beta.reshape(1, C),
      w1, b1.reshape(1, H), w2, b2.reshape(1, C))

    return out[:N].reshape(B, L1, L2, C)


def reference(z, gamma, beta, w1, b1, w2, b2):
    x = z.astype(jnp.float32)
    mean = jnp.mean(x, axis=-1, keepdims=True)
    var = jnp.mean((x - mean) ** 2, axis=-1, keepdims=True)
    xn = (x - mean) * jax.lax.rsqrt(var + LN_EPS) * gamma + beta
    h = jnp.maximum(xn @ w1 + b1, 0.0)
    return (h @ w2 + b2).astype(z.dtype)


if __name__ == "__main__":
    # Small, module-consistent shapes: pair rep (B, L, L, z_dim)
    B, L, z_dim, c_expand = 2, 8, 32, 2
    hidden = z_dim * c_expand

    key = jax.random.PRNGKey(0)
    kz, kg, kb, kw1, kb1, kw2, kb2 = jax.random.split(key, 7)

    z = jax.random.normal(kz, (B, L, L, z_dim), dtype=jnp.float32)

    # Deterministic synthetic parameters (shapes per module __init__)
    gamma = 1.0 + 0.01 * jax.random.normal(kg, (z_dim,), dtype=jnp.float32)
    beta = 0.01 * jax.random.normal(kb, (z_dim,), dtype=jnp.float32)
    # Linear weights stored as (in, out) so the kernel does x @ W + b
    w1 = jax.random.normal(kw1, (z_dim, hidden), dtype=jnp.float32) / jnp.sqrt(z_dim)
    b1 = 0.01 * jax.random.normal(kb1, (hidden,), dtype=jnp.float32)
    w2 = jax.random.normal(kw2, (hidden, z_dim), dtype=jnp.float32) / jnp.sqrt(hidden)
    b2 = 0.01 * jax.random.normal(kb2, (z_dim,), dtype=jnp.float32)

    out = pair_trans(z, gamma, beta, w1, b1, w2, b2)
    out = jax.block_until_ready(out)

    ref = reference(z, gamma, beta, w1, b1, w2, b2)
    assert out.shape == z.shape and out.dtype == z.dtype
    assert jnp.allclose(out, ref, atol=1e-4, rtol=1e-4), "mismatch vs reference"

    print("KERNEL_OK")
</pallas_src>

<mosaic_0001>
module attributes {stable_mosaic.version = 11 : i64} {
  func.func @_pairtrans_kernel(%arg0: i32, %arg1: memref<64x32xf32, #tpu.memory_space<vmem>>, %arg2: memref<1x32xf32, #tpu.memory_space<vmem>>, %arg3: memref<1x32xf32, #tpu.memory_space<vmem>>, %arg4: memref<32x64xf32, #tpu.memory_space<vmem>>, %arg5: memref<1x64xf32, #tpu.memory_space<vmem>>, %arg6: memref<64x32xf32, #tpu.memory_space<vmem>>, %arg7: memref<1x32xf32, #tpu.memory_space<vmem>>, %arg8: memref<64x32xf32, #tpu.memory_space<vmem>>) attributes {dimension_semantics = [#tpu.dimension_semantics<parallel>], iteration_bounds = array<i64: 2>, scalar_prefetch = 0 : i64, scratch_operands = 0 : i64, tpu.core_type = #tpu.core_type<tc>, window_params = [{transform_indices = @transform_0, window_bounds = array<i64: 64, 32>}, {pipeline_mode = #tpu.pipeline_mode<synchronous>, transform_indices = @transform_1, window_bounds = array<i64: 1, 32>}, {pipeline_mode = #tpu.pipeline_mode<synchronous>, transform_indices = @transform_2, window_bounds = array<i64: 1, 32>}, {pipeline_mode = #tpu.pipeline_mode<synchronous>, transform_indices = @transform_3, window_bounds = array<i64: 32, 64>}, {pipeline_mode = #tpu.pipeline_mode<synchronous>, transform_indices = @transform_4, window_bounds = array<i64: 1, 64>}, {pipeline_mode = #tpu.pipeline_mode<synchronous>, transform_indices = @transform_5, window_bounds = array<i64: 64, 32>}, {pipeline_mode = #tpu.pipeline_mode<synchronous>, transform_indices = @transform_6, window_bounds = array<i64: 1, 32>}, {transform_indices = @transform_7, window_bounds = array<i64: 64, 32>}]} {
    %c0 = arith.constant 0 : index
    %c0_0 = arith.constant 0 : index
    %0 = vector.load %arg1[%c0, %c0_0] : memref<64x32xf32, #tpu.memory_space<vmem>>, vector<64x32xf32>
    %cst = arith.constant dense<0.000000e+00> : vector<64xf32>
    %1 = vector.multi_reduction <add>, %0, %cst [1] : vector<64x32xf32> to vector<64xf32>
    %2 = vector.shape_cast %1 : vector<64xf32> to vector<64x1xf32>
    %cst_1 = arith.constant 3.200000e+01 : f32
    %3 = vector.broadcast %cst_1 : f32 to vector<64x1xf32>
    %4 = arith.divf %2, %3 : vector<64x1xf32>
    %5 = vector.broadcast %4 : vector<64x1xf32> to vector<64x32xf32>
    %6 = arith.subf %0, %5 : vector<64x32xf32>
    %7 = arith.mulf %6, %6 : vector<64x32xf32>
    %cst_2 = arith.constant dense<0.000000e+00> : vector<64xf32>
    %8 = vector.multi_reduction <add>, %7, %cst_2 [1] : vector<64x32xf32> to vector<64xf32>
    %9 = vector.shape_cast %8 : vector<64xf32> to vector<64x1xf32>
    %cst_3 = arith.constant 3.200000e+01 : f32
    %10 = vector.broadcast %cst_3 : f32 to vector<64x1xf32>
    %11 = arith.divf %9, %10 : vector<64x1xf32>
    %cst_4 = arith.constant 9.99999974E-6 : f32
    %12 = vector.broadcast %cst_4 : f32 to vector<64x1xf32>
    %13 = arith.addf %11, %12 : vector<64x1xf32>
    %14 = math.rsqrt %13 : vector<64x1xf32>
    %15 = vector.broadcast %14 : vector<64x1xf32> to vector<64x32xf32>
    %16 = arith.mulf %6, %15 : vector<64x32xf32>
    %c0_5 = arith.constant 0 : index
    %c0_6 = arith.constant 0 : index
    %17 = vector.load %arg2[%c0_5, %c0_6] : memref<1x32xf32, #tpu.memory_space<vmem>>, vector<1x32xf32>
    %18 = vector.broadcast %17 : vector<1x32xf32> to vector<64x32xf32>
    %19 = arith.mulf %16, %18 : vector<64x32xf32>
    %c0_7 = arith.constant 0 : index
    %c0_8 = arith.constant 0 : index
    %20 = vector.load %arg3[%c0_7, %c0_8] : memref<1x32xf32, #tpu.memory_space<vmem>>, vector<1x32xf32>
    %21 = vector.broadcast %20 : vector<1x32xf32> to vector<64x32xf32>
    %22 = arith.addf %19, %21 : vector<64x32xf32>
    %c0_9 = arith.constant 0 : index
    %c0_10 = arith.constant 0 : index
    %23 = vector.load %arg4[%c0_9, %c0_10] : memref<32x64xf32, #tpu.memory_space<vmem>>, vector<32x64xf32>
    %cst_11 = arith.constant dense<0.000000e+00> : vector<64x64xf32>
    %24 = tpu.matmul %22, %23, %cst_11 {dimension_numbers = #tpu.dot_dimension_numbers<[1], [0], [0], [1], [0, 0, 1, 1], [], []>} : vector<64x32xf32>, vector<32x64xf32>, vector<64x64xf32> -> vector<64x64xf32>
    %c0_12 = arith.constant 0 : index
    %c0_13 = arith.constant 0 : index
    %25 = vector.load %arg5[%c0_12, %c0_13] : memref<1x64xf32, #tpu.memory_space<vmem>>, vector<1x64xf32>
    %26 = vector.broadcast %25 : vector<1x64xf32> to vector<64x64xf32>
    %27 = arith.addf %24, %26 : vector<64x64xf32>
    %cst_14 = arith.constant 0.000000e+00 : f32
    %28 = vector.broadcast %cst_14 : f32 to vector<64x64xf32>
    %29 = arith.maximumf %27, %28 : vector<64x64xf32>
    %c0_15 = arith.constant 0 : index
    %c0_16 = arith.constant 0 : index
    %30 = vector.load %arg6[%c0_15, %c0_16] : memref<64x32xf32, #tpu.memory_space<vmem>>, vector<64x32xf32>
    %cst_17 = arith.constant dense<0.000000e+00> : vector<64x32xf32>
    %31 = tpu.matmul %29, %30, %cst_17 {dimension_numbers = #tpu.dot_dimension_numbers<[1], [0], [0], [1], [0, 0, 1, 1], [], []>} : vector<64x64xf32>, vector<64x32xf32>, vector<64x32xf32> -> vector<64x32xf32>
    %c0_18 = arith.constant 0 : index
    %c0_19 = arith.constant 0 : index
    %32 = vector.load %arg7[%c0_18, %c0_19] : memref<1x32xf32, #tpu.memory_space<vmem>>, vector<1x32xf32>
    %33 = vector.broadcast %32 : vector<1x32xf32> to vector<64x32xf32>
    %34 = arith.addf %31, %33 : vector<64x32xf32>
    %c0_20 = arith.constant 0 : index
    %c0_21 = arith.constant 0 : index
    %35 = vector.load %arg8[%c0_20, %c0_21] : memref<64x32xf32, #tpu.memory_space<vmem>>, vector<64x32xf32>
    tpu.vector_store %arg8[%c0_20, %c0_21], %34 {strides = array<i32>} : memref<64x32xf32, #tpu.memory_space<vmem>>, vector<64x32xf32>,
    return
  }
  func.func @transform_0(%arg0: i32) -> (i32, i32) {
    %c0_i32 = arith.constant 0 : i32
    %c0_i32_0 = arith.constant 0 : i32
    return %arg0, %c0_i32 : i32, i32
  }
  func.func @transform_1(%arg0: i32) -> (i32, i32) {
    %c0_i32 = arith.constant 0 : i32
    %c0_i32_0 = arith.constant 0 : i32
    %c0_i32_1 = arith.constant 0 : i32
    return %c0_i32, %c0_i32_0 : i32, i32
  }
  func.func @transform_2(%arg0: i32) -> (i32, i32) {
    %c0_i32 = arith.constant 0 : i32
    %c0_i32_0 = arith.constant 0 : i32
    %c0_i32_1 = arith.constant 0 : i32
    return %c0_i32, %c0_i32_0 : i32, i32
  }
  func.func @transform_3(%arg0: i32) -> (i32, i32) {
    %c0_i32 = arith.constant 0 : i32
    %c0_i32_0 = arith.constant 0 : i32
    %c0_i32_1 = arith.constant 0 : i32
    return %c0_i32, %c0_i32_0 : i32, i32
  }
  func.func @transform_4(%arg0: i32) -> (i32, i32) {
    %c0_i32 = arith.constant 0 : i32
    %c0_i32_0 = arith.constant 0 : i32
    %c0_i32_1 = arith.constant 0 : i32
    return %c0_i32, %c0_i32_0 : i32, i32
  }
  func.func @transform_5(%arg0: i32) -> (i32, i32) {
    %c0_i32 = arith.constant 0 : i32
    %c0_i32_0 = arith.constant 0 : i32
    %c0_i32_1 = arith.constant 0 : i32
    return %c0_i32, %c0_i32_0 : i32, i32
  }
  func.func @transform_6(%arg0: i32) -> (i32, i32) {
    %c0_i32 = arith.constant 0 : i32
    %c0_i32_0 = arith.constant 0 : i32
    %c0_i32_1 = arith.constant 0 : i32
    return %c0_i32, %c0_i32_0 : i32, i32
  }
  func.func @transform_7(%arg0: i32) -> (i32, i32) {
    %c0_i32 = arith.constant 0 : i32
    %c0_i32_0 = arith.constant 0 : i32
    return %arg0, %c0_i32 : i32, i32
  }
}

</mosaic_0001>

<llo_original>
// kernel: pair_trans.1
$region0: #{pair_trans.1}
  #allocation0 [shape = 'u32[]', space=smem, size = 0x4, offset = 0x4, fixed_abs, tag = 'smem constant byte address 0x4 - core index']
  #allocation1 [shape = 'u32[72,128]{1,0:T(1,128)}', space=vmem, size = 0x9000, scoped, tag = 'internal scratch']
  %s0 = inlined_call_operand.hbm [shape: f32[128,32], index: 0, kind: input, shape index: {}]
  %s1 = inlined_call_operand.vmem [shape: f32[1,32], index: 1, kind: input, shape index: {}]
  %s2 = inlined_call_operand.vmem [shape: f32[1,32], index: 2, kind: input, shape index: {}]
  %s3 = inlined_call_operand.vmem [shape: f32[32,64], index: 3, kind: input, shape index: {}]
  %s4 = inlined_call_operand.vmem [shape: f32[1,64], index: 4, kind: input, shape index: {}]
  %s5 = inlined_call_operand.vmem [shape: f32[64,32], index: 5, kind: input, shape index: {}]
  %s6 = inlined_call_operand.vmem [shape: f32[1,32], index: 6, kind: input, shape index: {}]
  %s7 = inlined_call_operand.hbm [shape: f32[128,32], index: 7, kind: output, shape index: {}]
  %s8 = sld [smem:[#allocation0]]
  $region65: #{pair_trans.1} parent=0
    _
  %s10 = ssub.s32 1, %s8
  %s11 = scalar_select 0, %s10, %s8
  $region1: #{pair_trans.1} parent=0
    #allocation2 [shape = 'u8[65536]{0}', space=vmem, size = 0x10000, scoped, tag = 'input window, operand 0']
    #allocation3 [shape = 's32[2]{0}', space=sflag, size = 0x8, scoped, tag = 'scoped memory for pair_trans.1']
    #allocation4 [shape = 's32[2]{0}', space=sflag, size = 0x8, scoped, tag = 'scoped memory for pair_trans.1']
    #allocation5 [shape = 'u8[65536]{0}', space=vmem, size = 0x10000, scoped, tag = 'output window, operand 0']
    %12 = vsyncpa [#allocation3], 0
    %s13 = scalar_lea.sflag [#allocation3], 1
    %14 = vsyncpa %s13, 0
    %15 = vsyncpa [#allocation4], 0
    %s16 = scalar_lea.sflag [#allocation4], 1
    %17 = vsyncpa %s16, 0
    loop: start=0, step=1, limit=4
    $region2: #{pair_trans.1} parent=1 // loop_pre_header
      _
    $region3: #{pair_trans.1} parent=1 // loop_header
      %s19 = sphi 0, %s23
      %p20 = scmp.ge.s32.totalorder %s19, 4
      %s29 = sphi 0, %s31
      %s32 = sphi 0, %s29
      %s33 = sphi 0, %s32
      %s49 = sphi 0, %s33
      %s53 = sphi 0, %s53
      %s55 = sphi 0, %s53
      %s56 = sphi 0, %s55
      %s70 = sphi 0, %s56
      %s74 = sphi 0, %s74
      %s76 = sphi 0, %s74
      %s77 = sphi 0, %s76
      %s91 = sphi 0, %s77
      %s95 = sphi 0, %s95
      %s97 = sphi 0, %s95
      %s98 = sphi 0, %s97
      %s112 = sphi 0, %s98
      %s116 = sphi 0, %s116
      %s118 = sphi 0, %s116
      %s119 = sphi 0, %s118
      %s133 = sphi 0, %s119
      %s137 = sphi 0, %s137
      %s139 = sphi 0, %s137
      %s140 = sphi 0, %s139
      %s154 = sphi 0, %s140
      %s158 = sphi 0, %s158
      %s160 = sphi 0, %s158
      %s161 = sphi 0, %s160
      %s175 = sphi 0, %s161
      %s181 = sphi 0, %s183
      %s184 = sphi 0, %s181
      %s185 = sphi 0, %s184
      %s201 = sphi 0, %s185
    $region4: #{pair_trans.1} parent=1 // loop_header_branch
      %22 = sbr.rel (%p20) target = $region8
    $region5: #{pair_trans.1} parent=1 // loop_body
      %s24 = ssub.s32 %s19, 1
      %s25 = ssub.s32 %s19, 2
      %s26 = sadd.s32 %s19, 1
      %s27 = ssub.s32 %s19, %s26
      %p28 = scmp.eq.s32.totalorder %s27, 0
      %s30 = sadd.s32 %s29, 1
      %s31 = scalar_select %p28, %s29, %s30
      %p34 = pneg %p28
      %p35 = scmp.eq.s32.totalorder %s19, 1
      %p36 = por %p34, %p35
      %p37 = scmp.ne.s32.totalorder %s29, %s32
      %p38 = scmp.eq.s32.totalorder %s19, 0
      %p39 = por %p37, %p38
      %p40 = scmp.ne.s32.totalorder %s29, %s32
      %p41 = scmp.eq.s32.totalorder %s24, 1
      %p42 = por %p40, %p41
      %p43 = scmp.ne.s32.totalorder %s32, %s33
      %p44 = scmp.eq.s32.totalorder %s24, 0
      %p45 = por %p43, %p44
      %p46 = scmp.ne.s32.totalorder %s32, %s33
      %p47 = scmp.eq.s32.totalorder %s25, 1
      %p48 = por %p46, %p47
      %p50 = scmp.ne.s32.totalorder %s33, %s49
      %p51 = scmp.eq.s32.totalorder %s25, 0
      %p52 = por %p50, %p51
      %s54 = sadd.s32 %s53, 1
      %p57 = scmp.eq.s32.totalorder %s19, 1
      %p58 = scmp.ne.s32.totalorder %s53, %s55
      %p59 = scmp.eq.s32.totalorder %s19, 0
      %p60 = por %p58, %p59
      %p61 = scmp.ne.s32.totalorder %s53, %s55
      %p62 = scmp.eq.s32.totalorder %s24, 1
      %p63 = por %p61, %p62
      %p64 = scmp.ne.s32.totalorder %s55, %s56
      %p65 = scmp.eq.s32.totalorder %s24, 0
      %p66 = por %p64, %p65
      %p67 = scmp.ne.s32.totalorder %s55, %s56
      %p68 = scmp.eq.s32.totalorder %s25, 1
      %p69 = por %p67, %p68
      %p71 = scmp.ne.s32.totalorder %s56, %s70
      %p72 = scmp.eq.s32.totalorder %s25, 0
      %p73 = por %p71, %p72
      %s75 = sadd.s32 %s74, 1
      %p78 = scmp.eq.s32.totalorder %s19, 1
      %p79 = scmp.ne.s32.totalorder %s74, %s76
      %p80 = scmp.eq.s32.totalorder %s19, 0
      %p81 = por %p79, %p80
      %p82 = scmp.ne.s32.totalorder %s74, %s76
      %p83 = scmp.eq.s32.totalorder %s24, 1
      %p84 = por %p82, %p83
      %p85 = scmp.ne.s32.totalorder %s76, %s77
      %p86 = scmp.eq.s32.totalorder %s24, 0
      %p87 = por %p85, %p86
      %p88 = scmp.ne.s32.totalorder %s76, %s77
      %p89 = scmp.eq.s32.totalorder %s25, 1
      %p90 = por %p88, %p89
      %p92 = scmp.ne.s32.totalorder %s77, %s91
      %p93 = scmp.eq.s32.totalorder %s25, 0
      %p94 = por %p92, %p93
      %s96 = sadd.s32 %s95, 1
      %p99 = scmp.eq.s32.totalorder %s19, 1
      %p100 = scmp.ne.s32.totalorder %s95, %s97
      %p101 = scmp.eq.s32.totalorder %s19, 0
      %p102 = por %p100, %p101
      %p103 = scmp.ne.s32.totalorder %s95, %s97
      %p104 = scmp.eq.s32.totalorder %s24, 1
      %p105 = por %p103, %p104
      %p106 = scmp.ne.s32.totalorder %s97, %s98
      %p107 = scmp.eq.s32.totalorder %s24, 0
      %p108 = por %p106, %p107
      %p109 = scmp.ne.s32.totalorder %s97, %s98
      %p110 = scmp.eq.s32.totalorder %s25, 1
      %p111 = por %p109, %p110
      %p113 = scmp.ne.s32.totalorder %s98, %s112
      %p114 = scmp.eq.s32.totalorder %s25, 0
      %p115 = por %p113, %p114
      %s117 = sadd.s32 %s116, 1
      %p120 = scmp.eq.s32.totalorder %s19, 1
      %p121 = scmp.ne.s32.totalorder %s116, %s118
      %p122 = scmp.eq.s32.totalorder %s19, 0
      %p123 = por %p121, %p122
      %p124 = scmp.ne.s32.totalorder %s116, %s118
      %p125 = scmp.eq.s32.totalorder %s24, 1
      %p126 = por %p124, %p125
      %p127 = scmp.ne.s32.totalorder %s118, %s119
      %p128 = scmp.eq.s32.totalorder %s24, 0
      %p129 = por %p127, %p128
      %p130 = scmp.ne.s32.totalorder %s118, %s119
      %p131 = scmp.eq.s32.totalorder %s25, 1
      %p132 = por %p130, %p131
      %p134 = scmp.ne.s32.totalorder %s119, %s133
      %p135 = scmp.eq.s32.totalorder %s25, 0
      %p136 = por %p134, %p135
      %s138 = sadd.s32 %s137, 1
      %p141 = scmp.eq.s32.totalorder %s19, 1
      %p142 = scmp.ne.s32.totalorder %s137, %s139
      %p143 = scmp.eq.s32.totalorder %s19, 0
      %p144 = por %p142, %p143
      %p145 = scmp.ne.s32.totalorder %s137, %s139
      %p146 = scmp.eq.s32.totalorder %s24, 1
      %p147 = por %p145, %p146
      %p148 = scmp.ne.s32.totalorder %s139, %s140
      %p149 = scmp.eq.s32.totalorder %s24, 0
      %p150 = por %p148, %p149
      %p151 = scmp.ne.s32.totalorder %s139, %s140
      %p152 = scmp.eq.s32.totalorder %s25, 1
      %p153 = por %p151, %p152
      %p155 = scmp.ne.s32.totalorder %s140, %s154
      %p156 = scmp.eq.s32.totalorder %s25, 0
      %p157 = por %p155, %p156
      %s159 = sadd.s32 %s158, 1
      %p162 = scmp.eq.s32.totalorder %s19, 1
      %p163 = scmp.ne.s32.totalorder %s158, %s160
      %p164 = scmp.eq.s32.totalorder %s19, 0
      %p165 = por %p163, %p164
      %p166 = scmp.ne.s32.totalorder %s158, %s160
      %p167 = scmp.eq.s32.totalorder %s24, 1
      %p168 = por %p166, %p167
      %p169 = scmp.ne.s32.totalorder %s160, %s161
      %p170 = scmp.eq.s32.totalorder %s24, 0
      %p171 = por %p169, %p170
      %p172 = scmp.ne.s32.totalorder %s160, %s161
      %p173 = scmp.eq.s32.totalorder %s25, 1
      %p174 = por %p172, %p173
      %p176 = scmp.ne.s32.totalorder %s161, %s175
      %p177 = scmp.eq.s32.totalorder %s25, 0
      %p178 = por %p176, %p177
      %s179 = ssub.s32 %s19, %s26
      %p180 = scmp.eq.s32.totalorder %s179, 0
      %s182 = sadd.s32 %s181, 1
      %s183 = scalar_select %p180, %s181, %s182
      %p186 = pneg %p180
      %p187 = scmp.eq.s32.totalorder %s19, 1
      %p188 = por %p186, %p187
      %p189 = scmp.ne.s32.totalorder %s181, %s184
      %p190 = scmp.eq.s32.totalorder %s19, 0
      %p191 = por %p189, %p190
      %p192 = scmp.ne.s32.totalorder %s181, %s184
      %p193 = scmp.eq.s32.totalorder %s24, 1
      %p194 = por %p192, %p193
      %p195 = scmp.ne.s32.totalorder %s184, %s185
      %p196 = scmp.eq.s32.totalorder %s24, 0
      %p197 = por %p195, %p196
      %p198 = scmp.ne.s32.totalorder %s184, %s185
      %p199 = scmp.eq.s32.totalorder %s25, 1
      %p200 = por %p198, %p199
      %p202 = scmp.ne.s32.totalorder %s185, %s201
      %p203 = scmp.eq.s32.totalorder %s25, 0
      %p204 = por %p202, %p203
      %p205 = scmp.le.s32.totalorder 1, %s19
      %p206 = scmp.lt.s32.totalorder %s19, 3
      %p207 = pnand %p205, %p206
      %p208 = pneg %p207
      // Predicated region
      $region9: #{pair_trans.1} parent=5 // pred_check
        _
      $region10: #{pair_trans.1} parent=5 // pred_check_branch
        %210 = sbr.rel (%p207) target = $region12
      $region11: #{pair_trans.1} parent=5 // pred_region
        %s211 = ssub.s32 %s19, 1
        // Predicated region
        $region13: #{pair_trans.1} parent=11 // pred_check
          %p212 = pneg %p66
        $region14: #{pair_trans.1} parent=11 // pred_check_branch
          %214 = sbr.rel (%p212) target = $region16
        $region15: #{pair_trans.1} parent=11 // pred_region
          _
        $region16: #{pair_trans.1} parent=11 // pred_fallthru
          _
        // Predicated region
        $region17: #{pair_trans.1} parent=11 // pred_check
          %p215 = pneg %p87
        $region18: #{pair_trans.1} parent=11 // pred_check_branch
          %217 = sbr.rel (%p215) target = $region20
        $region19: #{pair_trans.1} parent=11 // pred_region
          _
        $region20: #{pair_trans.1} parent=11 // pred_fallthru
          _
        // Predicated region
        $region21: #{pair_trans.1} parent=11 // pred_check
          %p218 = pneg %p108
        $region22: #{pair_trans.1} parent=11 // pred_check_branch
          %220 = sbr.rel (%p218) target = $region24
        $region23: #{pair_trans.1} parent=11 // pred_region
          _
        $region24: #{pair_trans.1} parent=11 // pred_fallthru
          _
        // Predicated region
        $region25: #{pair_trans.1} parent=11 // pred_check
          %p221 = pneg %p129
        $region26: #{pair_trans.1} parent=11 // pred_check_branch
          %223 = sbr.rel (%p221) target = $region28
        $region27: #{pair_trans.1} parent=11 // pred_region
          _
        $region28: #{pair_trans.1} parent=11 // pred_fallthru
          _
        // Predicated region
        $region29: #{pair_trans.1} parent=11 // pred_check
          %p224 = pneg %p150
        $region30: #{pair_trans.1} parent=11 // pred_check_branch
          %226 = sbr.rel (%p224) target = $region32
        $region31: #{pair_trans.1} parent=11 // pred_region
          _
        $region32: #{pair_trans.1} parent=11 // pred_fallthru
          _
        // Predicated region
        $region33: #{pair_trans.1} parent=11 // pred_check
          %p227 = pneg %p171
        $region34: #{pair_trans.1} parent=11 // pred_check_branch
          %229 = sbr.rel (%p227) target = $region36
        $region35: #{pair_trans.1} parent=11 // pred_region
          _
        $region36: #{pair_trans.1} parent=11 // pred_fallthru
          _
      $region12: #{pair_trans.1} parent=5 // pred_fallthru
        _
      %p230 = scmp.lt.s32.totalorder %s19, 2
      // Predicated region
      $region37: #{pair_trans.1} parent=5 // pred_check
        %p231 = pneg %p230
      $region38: #{pair_trans.1} parent=5 // pred_check_branch
        %233 = sbr.rel (%p231) target = $region40
      $region39: #{pair_trans.1} parent=5 // pred_region
        // Predicated region
        $region41: #{pair_trans.1} parent=39 // pred_check
          %p234 = pneg %p39
        $region42: #{pair_trans.1} parent=39 // pred_check_branch
          %236 = sbr.rel (%p234) target = $region44
        $region43: #{pair_trans.1} parent=39 // pred_region
          %s237 = sand.u32 %s29, 1
          %s238 = scalar_lea.sflag [#allocation3], %s237
          %s239 = sand.u32 %s29, 1
          %s240 = smul.addr %s239, 64
          %s241 = scalar_lea.vmem [#allocation2], %s240
          %s242 = smul.u32 8, %s19
          %244 = vsyncadd %s238, 0
          %s245 = smul.addr %s242, 8
          %s246 = scalar_lea.hbm %s0, %s245
          %s247 = sshll.u32 %s246, 4
          %s248 = int_to_ptr.hbm [resolvable:$true] %s247
          %s249 = sshll.u32 %s241, 4
          %s250 = int_to_ptr.vmem [resolvable:$true] %s249
          %255 = dma.hbm_to_vmem [thread:$0]  %s248, 1024, %s250, %s238, 128, 128, 8
        $region44: #{pair_trans.1} parent=39 // pred_fallthru
          _
      $region40: #{pair_trans.1} parent=5 // pred_fallthru
        _
      %p256 = scmp.le.s32.totalorder 1, %s19
      %p257 = scmp.lt.s32.totalorder %s19, 3
      %p258 = pnand %p256, %p257
      %p259 = pneg %p258
      // Predicated region
      $region45: #{pair_trans.1} parent=5 // pred_check
        _
      $region46: #{pair_trans.1} parent=5 // pred_check_branch
        %261 = sbr.rel (%p258) target = $region48
      $region47: #{pair_trans.1} parent=5 // pred_region
        %s262 = ssub.s32 %s19, 1
        %s263 = sand.u32 %s32, 1
        %s264 = scalar_lea.sflag [#allocation3], %s263
        %s265 = sand.u32 %s32, 1
        %s266 = smul.addr %s265, 64
        %s267 = scalar_lea.vmem [#allocation2], %s266
        // Predicated region
        $region49: #{pair_trans.1} parent=47 // pred_check
          %p268 = pneg %p45
        $region50: #{pair_trans.1} parent=47 // pred_check_branch
          %270 = sbr.rel (%p268) target = $region52
        $region51: #{pair_trans.1} parent=47 // pred_region
          %272 = dma.done %s264, 1024
        $region52: #{pair_trans.1} parent=47 // pred_fallthru
          _
        %s273 = sand.u32 %s32, 1
        %s274 = scalar_lea.sflag [#allocation3], %s273
        %s275 = sand.u32 %s32, 1
        %s276 = smul.addr %s275, 64
        %s277 = scalar_lea.vmem [#allocation2], %s276
        %p278 = pneg %p45
        %p279 = pneg %p42
        %p280 = pneg %p66
        %p281 = pneg %p63
        %p282 = pneg %p87
        %p283 = pneg %p84
        %p284 = pneg %p108
        %p285 = pneg %p105
        %p286 = pneg %p129
        %p287 = pneg %p126
        %p288 = pneg %p150
        %p289 = pneg %p147
        %p290 = pneg %p171
        %p291 = pneg %p168
        %p292 = pneg %p197
        %p293 = pneg %p194
        %s294 = sand.u32 %s184, 1
        %s295 = scalar_lea.sflag [#allocation4], %s294
        %s296 = sand.u32 %s184, 1
        %s297 = smul.addr %s296, 64
        %s298 = scalar_lea.vmem [#allocation5], %s297
        %s299 = smul.u32 8, %s24
        %s300 = smul.u32 8, %s24
        %v301 = vld [vmem:[%s267] sm:$0xff]
        %v302 = vld [vmem:[%s267 + $0x8] sm:$0xff]
        %v303 = vld [vmem:[%s267 + $0x10] sm:$0xff]
        %v304 = vld [vmem:[%s267 + $0x18] sm:$0xff]
        %v305 = vld [vmem:[%s267 + $0x20] sm:$0xff]
        %v306 = vld [vmem:[%s267 + $0x28] sm:$0xff]
        %v307 = vld [vmem:[%s267 + $0x30] sm:$0xff]
        %v308 = vld [vmem:[%s267 + $0x38] sm:$0xff]
        %vm309 = vcmask 261120
        %v310 = vsel %vm309, %v301, 0.0
        %311 = vadd.xlane.f32.xlu0 %v310
        %v312 = vpop.xlane.xlu0 %311
        %v313 = vsel %vm309, %v302, 0.0
        %314 = vadd.xlane.f32.xlu0 %v313
        %v315 = vpop.xlane.xlu0 %314
        %v316 = vsel %vm309, %v303, 0.0
        %317 = vadd.xlane.f32.xlu0 %v316
        %v318 = vpop.xlane.xlu0 %317
        %v319 = vsel %vm309, %v304, 0.0
        %320 = vadd.xlane.f32.xlu0 %v319
        %v321 = vpop.xlane.xlu0 %320
        %v322 = vsel %vm309, %v305, 0.0
        %323 = vadd.xlane.f32.xlu0 %v322
        %v324 = vpop.xlane.xlu0 %323
        %v325 = vsel %vm309, %v306, 0.0
        %326 = vadd.xlane.f32.xlu0 %v325
        %v327 = vpop.xlane.xlu0 %326
        %v328 = vsel %vm309, %v307, 0.0
        %329 = vadd.xlane.f32.xlu0 %v328
        %v330 = vpop.xlane.xlu0 %329
        %v331 = vsel %vm309, %v308, 0.0
        %332 = vadd.xlane.f32.xlu0 %v331
        %v333 = vpop.xlane.xlu0 %332
        %v334 = vrcp.pop 32.0
        %v335 = vmul.f32 32.0, %v334
        %v336 = vsub.f32 1.0, %v335
        %v337 = vmul.f32 %v334, %v336
        %v338 = vadd.f32 %v334, %v337
        %vm339 = vweird.f32 %v334
        %v340 = vsel %vm339, %v334, %v338
        %v341 = vmul.f32 %v312, %v340
        %v342 = vmul.f32 %v315, %v340
        %v343 = vmul.f32 %v318, %v340
        %v344 = vmul.f32 %v321, %v340
        %v345 = vmul.f32 %v324, %v340
        %v346 = vmul.f32 %v327, %v340
        %v347 = vmul.f32 %v330, %v340
        %v348 = vmul.f32 %v333, %v340
        %v349 = vsub.f32 %v301, %v341
        %v350 = vsub.f32 %v302, %v342
        %v351 = vsub.f32 %v303, %v343
        %v352 = vsub.f32 %v304, %v344
        %v353 = vsub.f32 %v305, %v345
        %v354 = vsub.f32 %v306, %v346
        %v355 = vsub.f32 %v307, %v347
        %v356 = vsub.f32 %v308, %v348
        %v357 = vmul.f32 %v349, %v349
        %v358 = vmul.f32 %v350, %v350
        %v359 = vmul.f32 %v351, %v351
        %v360 = vmul.f32 %v352, %v352
        %v361 = vmul.f32 %v353, %v353
        %v362 = vmul.f32 %v354, %v354
        %v363 = vmul.f32 %v355, %v355
        %v364 = vmul.f32 %v356, %v356
        %v365 = vsel %vm309, %v357, 0.0
        %366 = vadd.xlane.f32.xlu0 %v365
        %v367 = vpop.xlane.xlu0 %366
        %v368 = vsel %vm309, %v358, 0.0
        %369 = vadd.xlane.f32.xlu0 %v368
        %v370 = vpop.xlane.xlu0 %369
        %v371 = vsel %vm309, %v359, 0.0
        %372 = vadd.xlane.f32.xlu0 %v371
        %v373 = vpop.xlane.xlu0 %372
        %v374 = vsel %vm309, %v360, 0.0
        %375 = vadd.xlane.f32.xlu0 %v374
        %v376 = vpop.xlane.xlu0 %375
        %v377 = vsel %vm309, %v361, 0.0
        %378 = vadd.xlane.f32.xlu0 %v377
        %v379 = vpop.xlane.xlu0 %378
        %v380 = vsel %vm309, %v362, 0.0
        %381 = vadd.xlane.f32.xlu0 %v380
        %v382 = vpop.xlane.xlu0 %381
        %v383 = vsel %vm309, %v363, 0.0
        %384 = vadd.xlane.f32.xlu0 %v383
        %v385 = vpop.xlane.xlu0 %384
        %v386 = vsel %vm309, %v364, 0.0
        %387 = vadd.xlane.f32.xlu0 %v386
        %v388 = vpop.xlane.xlu0 %387
        %v389 = vmul.f32 %v367, %v340
        %v390 = vmul.f32 %v370, %v340
        %v391 = vmul.f32 %v373, %v340
        %v392 = vmul.f32 %v376, %v340
        %v393 = vmul.f32 %v379, %v340
        %v394 = vmul.f32 %v382, %v340
        %v395 = vmul.f32 %v385, %v340
        %v396 = vmul.f32 %v388, %v340
        %v397 = vadd.f32 %v389, 1e-05
        %v398 = vadd.f32 %v390, 1e-05
        %v399 = vadd.f32 %v391, 1e-05
        %v400 = vadd.f32 %v392, 1e-05
        %v401 = vadd.f32 %v393, 1e-05
        %v402 = vadd.f32 %v394, 1e-05
        %v403 = vadd.f32 %v395, 1e-05
        %v404 = vadd.f32 %v396, 1e-05
        %v405 = vrsqrt.pop %v397
        %v406 = vmul.f32 %v405, %v397
        %v407 = vmul.f32 %v406, %v405
        %v408 = vmul.f32 0.5, %v407
        %v409 = vsub.f32 1.5, %v408
        %v410 = vmul.f32 %v405, %v409
        %vm411 = vweird.f32 %v397
        %vm412 = vweird.f32 %v405
        %vm413 = vmor %vm411, %vm412
        %v414 = vsel %vm413, %v405, %v410
        %v415 = vrsqrt.pop %v398
        %v416 = vmul.f32 %v415, %v398
        %v417 = vmul.f32 %v416, %v415
        %v418 = vmul.f32 0.5, %v417
        %v419 = vsub.f32 1.5, %v418
        %v420 = vmul.f32 %v415, %v419
        %vm421 = vweird.f32 %v398
        %vm422 = vweird.f32 %v415
        %vm423 = vmor %vm421, %vm422
        %v424 = vsel %vm423, %v415, %v420
        %v425 = vrsqrt.pop %v399
        %v426 = vmul.f32 %v425, %v399
        %v427 = vmul.f32 %v426, %v425
        %v428 = vmul.f32 0.5, %v427
        %v429 = vsub.f32 1.5, %v428
        %v430 = vmul.f32 %v425, %v429
        %vm431 = vweird.f32 %v399
        %vm432 = vweird.f32 %v425
        %vm433 = vmor %vm431, %vm432
        %v434 = vsel %vm433, %v425, %v430
        %v435 = vrsqrt.pop %v400
        %v436 = vmul.f32 %v435, %v400
        %v437 = vmul.f32 %v436, %v435
        %v438 = vmul.f32 0.5, %v437
        %v439 = vsub.f32 1.5, %v438
        %v440 = vmul.f32 %v435, %v439
        %vm441 = vweird.f32 %v400
        %vm442 = vweird.f32 %v435
        %vm443 = vmor %vm441, %vm442
        %v444 = vsel %vm443, %v435, %v440
        %v445 = vrsqrt.pop %v401
        %v446 = vmul.f32 %v445, %v401
        %v447 = vmul.f32 %v446, %v445
        %v448 = vmul.f32 0.5, %v447
        %v449 = vsub.f32 1.5, %v448
        %v450 = vmul.f32 %v445, %v449
        %vm451 = vweird.f32 %v401
        %vm452 = vweird.f32 %v445
        %vm453 = vmor %vm451, %vm452
        %v454 = vsel %vm453, %v445, %v450
        %v455 = vrsqrt.pop %v402
        %v456 = vmul.f32 %v455, %v402
        %v457 = vmul.f32 %v456, %v455
        %v458 = vmul.f32 0.5, %v457
        %v459 = vsub.f32 1.5, %v458
        %v460 = vmul.f32 %v455, %v459
        %vm461 = vweird.f32 %v402
        %vm462 = vweird.f32 %v455
        %vm463 = vmor %vm461, %vm462
        %v464 = vsel %vm463, %v455, %v460
        %v465 = vrsqrt.pop %v403
        %v466 = vmul.f32 %v465, %v403
        %v467 = vmul.f32 %v466, %v465
        %v468 = vmul.f32 0.5, %v467
        %v469 = vsub.f32 1.5, %v468
        %v470 = vmul.f32 %v465, %v469
        %vm471 = vweird.f32 %v403
        %vm472 = vweird.f32 %v465
        %vm473 = vmor %vm471, %vm472
        %v474 = vsel %vm473, %v465, %v470
        %v475 = vrsqrt.pop %v404
        %v476 = vmul.f32 %v475, %v404
        %v477 = vmul.f32 %v476, %v475
        %v478 = vmul.f32 0.5, %v477
        %v479 = vsub.f32 1.5, %v478
        %v480 = vmul.f32 %v475, %v479
        %vm481 = vweird.f32 %v404
        %vm482 = vweird.f32 %v475
        %vm483 = vmor %vm481, %vm482
        %v484 = vsel %vm483, %v475, %v480
        %v485 = vmul.f32 %v349, %v414
        %v486 = vmul.f32 %v350, %v424
        %v487 = vmul.f32 %v351, %v434
        %v488 = vmul.f32 %v352, %v444
        %v489 = vmul.f32 %v353, %v454
        %v490 = vmul.f32 %v354, %v464
        %v491 = vmul.f32 %v355, %v474
        %v492 = vmul.f32 %v356, %v484
        %v493 = vld [vmem:[%s1] sm:$0x1]
        %v495 = vperm.slane %v493, 0
        %v497 = vmul.f32 %v485, %v495
        %v498 = vmul.f32 %v486, %v495
        %v499 = vmul.f32 %v487, %v495
        %v500 = vmul.f32 %v488, %v495
        %v501 = vmul.f32 %v489, %v495
        %v502 = vmul.f32 %v490, %v495
        %v503 = vmul.f32 %v491, %v495
        %v504 = vmul.f32 %v492, %v495
        %v505 = vld [vmem:[%s2] sm:$0x1]
        %v507 = vperm.slane %v505, 0
        %v509 = vadd.f32 %v497, %v507
        %v510 = vadd.f32 %v498, %v507
        %v511 = vadd.f32 %v499, %v507
        %v512 = vadd.f32 %v500, %v507
        %v513 = vadd.f32 %v501, %v507
        %v514 = vadd.f32 %v502, %v507
        %v515 = vadd.f32 %v503, %v507
        %v516 = vadd.f32 %v504, %v507
        %v517 = vld [vmem:[%s3] sm:$0xff]
        %v518 = vld [vmem:[%s3 + $0x8] sm:$0xff]
        %v519 = vld [vmem:[%s3 + $0x10] sm:$0xff]
        %v520 = vld [vmem:[%s3 + $0x18] sm:$0xff]
        %v521 = vld [vmem:[%s4] sm:$0x1]
        %v523 = vperm.slane %v521, 0
        %v526 = vsel %vm309, %v509, 0
        %v529 = vsel %vm309, %v510, 0
        %v532 = vsel %vm309, %v511, 0
        %v535 = vsel %vm309, %v512, 0
        %v538 = vsel %vm309, %v513, 0
        %v541 = vsel %vm309, %v514, 0
        %v544 = vsel %vm309, %v515, 0
        %v547 = vsel %vm309, %v516, 0
        %549 = vmatpush.msra.mxu0 0.0
        %550 = vmatpush.msra.mxu0 0.0
        %551 = vmatpush.msra.mxu0 0.0
        %552 = vmatpush.msra.mxu0 0.0
        %553 = vmatpush.msra.mxu0 0.0
        %554 = vmatpush.msra.mxu0 0.0
        %555 = vmatpush.msra.mxu0 0.0
        %556 = vmatpush.msra.mxu0 0.0
        %557 = vmatpush.msra.mxu0 0.0
        %558 = vmatpush.msra.mxu0 0.0
        %559 = vmatpush.msra.mxu0 0.0
        %560 = vmatpush.msra.mxu0 0.0
        %561 = vmatpush.msra.mxu0 %v520
        %562 = vmatpush.msra.mxu0 %v519
        %563 = vmatpush.msra.mxu0 %v518
        %564 = vmatpush.msra.mxu0 %v517
        %565 = vmatmul.f32.gmra.mxu0 %v526
        %v566 = vpop.f32.mrf.mxu0
        %v567 = vadd.f32 %v523, %v566
        %568 = vmatmul.f32.gmra.mxu0 %v529
        %v569 = vpop.f32.mrf.mxu0
        %v570 = vadd.f32 %v523, %v569
        %571 = vmatmul.f32.gmra.mxu0 %v532
        %v572 = vpop.f32.mrf.mxu0
        %v573 = vadd.f32 %v523, %v572
        %574 = vmatmul.f32.gmra.mxu0 %v535
        %v575 = vpop.f32.mrf.mxu0
        %v576 = vadd.f32 %v523, %v575
        %577 = vmatmul.f32.gmra.mxu0 %v538
        %v578 = vpop.f32.mrf.mxu0
        %v579 = vadd.f32 %v523, %v578
        %580 = vmatmul.f32.gmra.mxu0 %v541
        %v581 = vpop.f32.mrf.mxu0
        %v582 = vadd.f32 %v523, %v581
        %583 = vmatmul.f32.gmra.mxu0 %v544
        %v584 = vpop.f32.mrf.mxu0
        %v585 = vadd.f32 %v523, %v584
        %586 = vmatmul.f32.gmra.mxu0 %v547
        %v587 = vpop.f32.mrf.mxu0
        %v588 = vadd.f32 %v523, %v587
        %589 = vdwg.mxu0
        %v590 = vmax.f32 %v567, 0.0
        %v591 = vmax.f32 %v570, 0.0
        %v592 = vmax.f32 %v573, 0.0
        %v593 = vmax.f32 %v576, 0.0
        %v594 = vmax.f32 %v579, 0.0
        %v595 = vmax.f32 %v582, 0.0
        %v596 = vmax.f32 %v585, 0.0
        %v597 = vmax.f32 %v588, 0.0
        %v598 = vld [vmem:[%s5] sm:$0xff]
        %v599 = vld [vmem:[%s5 + $0x8] sm:$0xff]
        %v600 = vld [vmem:[%s5 + $0x10] sm:$0xff]
        %v601 = vld [vmem:[%s5 + $0x18] sm:$0xff]
        %v602 = vld [vmem:[%s5 + $0x20] sm:$0xff]
        %v603 = vld [vmem:[%s5 + $0x28] sm:$0xff]
        %v604 = vld [vmem:[%s5 + $0x30] sm:$0xff]
        %v605 = vld [vmem:[%s5 + $0x38] sm:$0xff]
        %v606 = vld [vmem:[%s6] sm:$0x1]
        %v608 = vperm.slane %v606, 0
        %vm610 = vcmask 523264
        %v612 = vsel %vm610, %v590, 0
        %v615 = vsel %vm610, %v591, 0
        %v618 = vsel %vm610, %v592, 0
        %v621 = vsel %vm610, %v593, 0
        %v624 = vsel %vm610, %v594, 0
        %v627 = vsel %vm610, %v595, 0
        %v630 = vsel %vm610, %v596, 0
        %v633 = vsel %vm610, %v597, 0
        %635 = vmatpush.msra.mxu0 0.0
        %636 = vmatpush.msra.mxu0 0.0
        %637 = vmatpush.msra.mxu0 0.0
        %638 = vmatpush.msra.mxu0 0.0
        %639 = vmatpush.msra.mxu0 0.0
        %640 = vmatpush.msra.mxu0 0.0
        %641 = vmatpush.msra.mxu0 0.0
        %642 = vmatpush.msra.mxu0 0.0
        %643 = vmatpush.msra.mxu0 %v605
        %644 = vmatpush.msra.mxu0 %v604
        %645 = vmatpush.msra.mxu0 %v603
        %646 = vmatpush.msra.mxu0 %v602
        %647 = vmatpush.msra.mxu0 %v601
        %648 = vmatpush.msra.mxu0 %v600
        %649 = vmatpush.msra.mxu0 %v599
        %650 = vmatpush.msra.mxu0 %v598
        %651 = vmatmul.f32.gmra.mxu0 %v612
        %v652 = vpop.f32.mrf.mxu0
        %v653 = vadd.f32 %v608, %v652
        %654 = vmatmul.f32.gmra.mxu0 %v615
        %v655 = vpop.f32.mrf.mxu0
        %v656 = vadd.f32 %v608, %v655
        %657 = vmatmul.f32.gmra.mxu0 %v618
        %v658 = vpop.f32.mrf.mxu0
        %v659 = vadd.f32 %v608, %v658
        %660 = vmatmul.f32.gmra.mxu0 %v621
        %v661 = vpop.f32.mrf.mxu0
        %v662 = vadd.f32 %v608, %v661
        %663 = vmatmul.f32.gmra.mxu0 %v624
        %v664 = vpop.f32.mrf.mxu0
        %v665 = vadd.f32 %v608, %v664
        %666 = vmatmul.f32.gmra.mxu0 %v627
        %v667 = vpop.f32.mrf.mxu0
        %v668 = vadd.f32 %v608, %v667
        %669 = vmatmul.f32.gmra.mxu0 %v630
        %v670 = vpop.f32.mrf.mxu0
        %v671 = vadd.f32 %v608, %v670
        %672 = vmatmul.f32.gmra.mxu0 %v633
        %v673 = vpop.f32.mrf.mxu0
        %v674 = vadd.f32 %v608, %v673
        %675 = vdwg.mxu0
        %676 = vst.msk [vmem:[%s298] sm:$0xff] %vm309, %v653
        %677 = vst.msk [vmem:[%s298 + $0x8] sm:$0xff] %vm309, %v656
        %678 = vst.msk [vmem:[%s298 + $0x10] sm:$0xff] %vm309, %v659
        %679 = vst.msk [vmem:[%s298 + $0x18] sm:$0xff] %vm309, %v662
        %680 = vst.msk [vmem:[%s298 + $0x20] sm:$0xff] %vm309, %v665
        %681 = vst.msk [vmem:[%s298 + $0x28] sm:$0xff] %vm309, %v668
        %682 = vst.msk [vmem:[%s298 + $0x30] sm:$0xff] %vm309, %v671
        %683 = vst.msk [vmem:[%s298 + $0x38] sm:$0xff] %vm309, %v674
        %s684 = sand.u32 %s184, 1
        %s685 = scalar_lea.sflag [#allocation4], %s684
        %s686 = sand.u32 %s184, 1
        %s687 = smul.addr %s686, 64
        %s688 = scalar_lea.vmem [#allocation5], %s687
        // Predicated region
        $region53: #{pair_trans.1} parent=47 // pred_check
          %p689 = pneg %p194
        $region54: #{pair_trans.1} parent=47 // pred_check_branch
          %691 = sbr.rel (%p689) target = $region56
        $region55: #{pair_trans.1} parent=47 // pred_region
          %s692 = smul.u32 8, %s24
          %694 = vsyncadd %s685, 0
          %s695 = smul.addr %s692, 8
          %s696 = scalar_lea.hbm %s7, %s695
          %s697 = sshll.u32 %s688, 4
          %s698 = int_to_ptr.vmem [resolvable:$true] %s697
          %s699 = sshll.u32 %s696, 4
          %s700 = int_to_ptr.hbm [resolvable:$true] %s699
          %705 = dma.vmem_to_hbm [thread:$0]  %s698, 1024, %s700, %s685, 128, 128, 8
        $region56: #{pair_trans.1} parent=47 // pred_fallthru
          _
      $region48: #{pair_trans.1} parent=5 // pred_fallthru
        _
      %p706 = scmp.le.s32.totalorder 2, %s19
      // Predicated region
      $region57: #{pair_trans.1} parent=5 // pred_check
        %p707 = pneg %p706
      $region58: #{pair_trans.1} parent=5 // pred_check_branch
        %709 = sbr.rel (%p707) target = $region60
      $region59: #{pair_trans.1} parent=5 // pred_region
        %s710 = ssub.s32 %s19, 2
        // Predicated region
        $region61: #{pair_trans.1} parent=59 // pred_check
          %p711 = pneg %p200
        $region62: #{pair_trans.1} parent=59 // pred_check_branch
          %713 = sbr.rel (%p711) target = $region64
        $region63: #{pair_trans.1} parent=59 // pred_region
          %s714 = sand.u32 %s185, 1
          %s715 = scalar_lea.sflag [#allocation4], %s714
          %s716 = sand.u32 %s185, 1
          %s717 = smul.addr %s716, 64
          %s718 = scalar_lea.vmem [#allocation5], %s717
          %720 = dma.done %s715, 1024
        $region64: #{pair_trans.1} parent=59 // pred_fallthru
          _
      $region60: #{pair_trans.1} parent=5 // pred_fallthru
        _
    $region6: #{pair_trans.1} parent=1 // loop_footer
      %s23 = sadd.s32 1, %s19
    $region7: #{pair_trans.1} parent=1 // loop_footer_branch
      %18 = sbr.rel target = $region3
    $region8: #{pair_trans.1} parent=1 // loop_exit
      _
    %721 = vsyncpa [#allocation3], 1
    %s722 = scalar_lea.sflag [#allocation3], 1
    %723 = vsyncpa %s722, 1
    %724 = vsyncpa [#allocation4], 1
    %s725 = scalar_lea.sflag [#allocation4], 1
    %726 = vsyncpa %s725, 1

</llo_original>
